<compile_context>
chip_gen: v6e
topology: v6e:2x2x1
jax: 0.10.0
libtpu: 0.0.40
codegen_flags: <defaults>
</compile_context>

<pallas_src>
import jax
import jax.numpy as jnp
from jax.experimental import pallas as pl
from jax.experimental.pallas import tpu as pltpu


def _cdiv(a, b):
    return (a + b - 1) // b


def _round_up(x, m):
    return ((x + m - 1) // m) * m


def _sqexp_kernel(gamma_ref, sv2_ref, x1_ref, x2t_ref, sq1_ref, sq2_ref, o_ref):
    # gamma_ref / sv2_ref: (1,) scalars in SMEM  (gamma = -0.5/ls^2, sv2 = sv^2)
    # x1_ref:  (tm, D)  VMEM tile
    # x2t_ref: (D, tn)  VMEM tile (x2 pre-transposed in the wrapper)
    # sq1_ref: (tm, 1)  precomputed ||x1||^2 rows
    # sq2_ref: (1, tn)  precomputed ||x2||^2 rows
    # o_ref:   (tm, tn) output tile (f32 or bf16; cast only at the store)
    cross = jnp.dot(x1_ref[...], x2t_ref[...],
                    preferred_element_type=jnp.float32)          # MXU, f32 acc
    sqdist = sq1_ref[...] + sq2_ref[...] - 2.0 * cross           # VPU
    sqdist = jnp.maximum(sqdist, 0.0)                            # guard cancellation
    o_ref[...] = (sv2_ref[0] * jnp.exp(sqdist * gamma_ref[0])).astype(o_ref.dtype)


def squared_exponential_kernel(x1, x2, length_scale, signal_variance, *,
                               tm=512, tn=1024, out_dtype=jnp.float32):
    """Pallas equivalent of SquaredExponentialKernel.forward(x1, x2)."""
    n1, d = x1.shape
    n2, d2 = x2.shape
    assert d == d2, "feature dims must match"

    # Scalar params folded once in the wrapper (no per-element divide in-kernel).
    ls = jnp.asarray(length_scale, jnp.float32).reshape(())
    sv = jnp.asarray(signal_variance, jnp.float32).reshape(())
    gamma = (-0.5 / (ls * ls)).reshape((1,))
    sv2 = (sv * sv).reshape((1,))

    # Row norms hoisted out of the grid loop (computed once, in f32).
    x1f = x1.astype(jnp.float32)
    x2f = x2.astype(jnp.float32)
    sq1 = jnp.sum(x1f * x1f, axis=1, keepdims=True)        # (n1, 1)
    sq2 = jnp.sum(x2f * x2f, axis=1, keepdims=True).T      # (1, n2)

    # Cross-term operands: pre-transpose x2 (no in-kernel XLU transpose).  For
    # fat feature dims with f32 inputs, feed the MXU bf16 operands (f32xf32 on
    # the MXU is multi-pass bf16 and doubles x1/x2t traffic); exact f32 acc.
    if d >= 512 and x1.dtype == jnp.float32:
        x1_mm = x1.astype(jnp.bfloat16)
        x2t_mm = x2.astype(jnp.bfloat16).T                  # (d, n2)
    else:
        x1_mm = x1
        x2t_mm = x2.T                                       # (d, n2)

    in_bytes = x1_mm.dtype.itemsize
    out_bytes = jnp.dtype(out_dtype).itemsize

    # ---- Tile selection -------------------------------------------------
    # Start from large, lane-dense tiles; clamp to the (rounded-up) problem.
    tm = min(tm, _round_up(n1, 8))
    tn = min(tn, _round_up(n2, 128))

    # Keep double-buffered VMEM usage under the smallest default scoped limit
    # (16 MiB on v5e; 32 MiB default on v6e/v7x, 64 MiB physical on v7x).
    # (tm,1)/(1,tn) blocks are lane/sublane padded to (tm,128)/(8,tn) in VMEM.
    def _vmem_bytes(tm_, tn_):
        return 2 * (tm_ * d * in_bytes + d * tn_ * in_bytes
                    + tm_ * 128 * 4 + 8 * tn_ * 4
                    + tm_ * tn_ * out_bytes)

    budget = 12 * 1024 * 1024
    while _vmem_bytes(tm, tn) > budget:
        if tn > 256 and tn >= tm:
            tn = _round_up(tn // 2, 128)
        elif tm > 256:
            tm = _round_up(tm // 2, 8)
        else:
            # TODO(synk): K-tile over D (third "arbitrary" grid axis + f32 VMEM
            # accumulator) for very large feature dims instead of tiny tiles.
            break

    # Megacore (v7x has 2 TensorCores sharing the grid): if the grid would
    # collapse to a single block on a large problem, split one parallel axis
    # so both cores get work (keeps tiles >= 256 wide).
    if _cdiv(n1, tm) * _cdiv(n2, tn) == 1:
        if tm >= 512:
            tm = _round_up(_cdiv(n1, 2), 8)
        elif tn >= 512:
            tn = _round_up(_cdiv(n2, 2), 128)

    grid = (_cdiv(n1, tm), _cdiv(n2, tn))

    cost = pl.CostEstimate(
        flops=2 * n1 * n2 * d,
        transcendentals=n1 * n2,
        bytes_accessed=(in_bytes * (n1 * d + n2 * d)
                        + 4 * (n1 + n2)
                        + out_bytes * n1 * n2),
    )

    out = pl.pallas_call(
        _sqexp_kernel,
        out_shape=jax.ShapeDtypeStruct((n1, n2), out_dtype),
        grid_spec=pltpu.PrefetchScalarGridSpec(
            num_scalar_prefetch=0,
            grid=grid,
            in_specs=[
                pl.BlockSpec(memory_space=pltpu.SMEM),            # gamma
                pl.BlockSpec(memory_space=pltpu.SMEM),            # sv^2
                pl.BlockSpec((tm, d), lambda i, j: (i, 0)),       # x1 tile
                pl.BlockSpec((d, tn), lambda i, j: (0, j)),       # x2^T tile
                pl.BlockSpec((tm, 1), lambda i, j: (i, 0)),       # ||x1||^2 tile
                pl.BlockSpec((1, tn), lambda i, j: (0, j)),       # ||x2||^2 tile
            ],
            out_specs=pl.BlockSpec((tm, tn), lambda i, j: (i, j)),
        ),
        compiler_params=pltpu.CompilerParams(
            dimension_semantics=("parallel", "parallel")),
        cost_estimate=cost,
    )(gamma, sv2, x1_mm, x2t_mm, sq1, sq2)
    return out


def _reference(x1, x2, length_scale, signal_variance):
    sqdist = (jnp.sum(x1.astype(jnp.float32) ** 2, 1).reshape(-1, 1)
              + jnp.sum(x2.astype(jnp.float32) ** 2, 1)
              - 2.0 * x1.astype(jnp.float32) @ x2.astype(jnp.float32).T)
    return (signal_variance ** 2) * jnp.exp(-0.5 * sqdist / (length_scale ** 2))


if __name__ == "__main__":
    key = jax.random.PRNGKey(0)
    k1, k2, k3, k4 = jax.random.split(key, 4)

    # Non-trivial parameter values to exercise the scaling math.
    length_scale = 1.5
    signal_variance = 0.8

    # Case 1: tile-aligned shapes, default f32 output.
    N1, N2, D = 128, 256, 32
    x1 = jax.random.normal(k1, (N1, D), dtype=jnp.float32)
    x2 = jax.random.normal(k2, (N2, D), dtype=jnp.float32)
    out = squared_exponential_kernel(x1, x2, length_scale, signal_variance)
    out = jax.block_until_ready(out)
    ref = _reference(x1, x2, length_scale, signal_variance)
    assert out.shape == (N1, N2) and out.dtype == jnp.float32
    assert jnp.allclose(out, ref, atol=1e-5, rtol=1e-5)

    # Case 2: ragged shapes — exercises the cdiv-grid masked edge blocks
    # (no pad / slice extra HBM pass anymore).
    M1, M2 = 100, 200
    y1 = jax.random.normal(k3, (M1, D), dtype=jnp.float32)
    y2 = jax.random.normal(k4, (M2, D), dtype=jnp.float32)
    out2 = squared_exponential_kernel(y1, y2, length_scale, signal_variance)
    out2 = jax.block_until_ready(out2)
    ref2 = _reference(y1, y2, length_scale, signal_variance)
    assert out2.shape == (M1, M2)
    assert jnp.allclose(out2, ref2, atol=1e-5, rtol=1e-5)

    # Case 3: opt-in bf16 output (halves the dominant HBM store stream).
    out3 = squared_exponential_kernel(x1, x2, length_scale, signal_variance,
                                      out_dtype=jnp.bfloat16)
    out3 = jax.block_until_ready(out3)
    assert out3.shape == (N1, N2) and out3.dtype == jnp.bfloat16
    assert jnp.allclose(out3.astype(jnp.float32), ref, atol=2e-2, rtol=2e-2)

    print("KERNEL_OK")
</pallas_src>

<mosaic_0001>
module attributes {stable_mosaic.version = 11 : i64} {
  func.func @_sqexp_kernel(%arg0: i32, %arg1: i32, %arg2: memref<1xf32, #tpu.memory_space<smem>>, %arg3: memref<1xf32, #tpu.memory_space<smem>>, %arg4: memref<128x32xf32, #tpu.memory_space<vmem>>, %arg5: memref<32x256xf32, #tpu.memory_space<vmem>>, %arg6: memref<128x1xf32, #tpu.memory_space<vmem>>, %arg7: memref<1x256xf32, #tpu.memory_space<vmem>>, %arg8: memref<128x256xf32, #tpu.memory_space<vmem>>) attributes {dimension_semantics = [#tpu.dimension_semantics<parallel>, #tpu.dimension_semantics<parallel>], iteration_bounds = array<i64: 1, 1>, scalar_prefetch = 0 : i64, scratch_operands = 0 : i64, tpu.core_type = #tpu.core_type<tc>, window_params = [{transform_indices = @transform_0, window_bounds = array<i64: 1>}, {transform_indices = @transform_1, window_bounds = array<i64: 1>}, {transform_indices = @transform_2, window_bounds = array<i64: 128, 32>}, {transform_indices = @transform_3, window_bounds = array<i64: 32, 256>}, {transform_indices = @transform_4, window_bounds = array<i64: 128, 1>}, {transform_indices = @transform_5, window_bounds = array<i64: 1, 256>}, {transform_indices = @transform_6, window_bounds = array<i64: 128, 256>}]} {
    %c0 = arith.constant 0 : index
    %c0_0 = arith.constant 0 : index
    %0 = vector.load %arg4[%c0, %c0_0] : memref<128x32xf32, #tpu.memory_space<vmem>>, vector<128x32xf32>
    %c0_1 = arith.constant 0 : index
    %c0_2 = arith.constant 0 : index
    %1 = vector.load %arg5[%c0_1, %c0_2] : memref<32x256xf32, #tpu.memory_space<vmem>>, vector<32x256xf32>
    %cst = arith.constant dense<0.000000e+00> : vector<128x256xf32>
    %2 = tpu.matmul %0, %1, %cst {dimension_numbers = #tpu.dot_dimension_numbers<[1], [0], [0], [1], [0, 0, 1, 1], [], []>} : vector<128x32xf32>, vector<32x256xf32>, vector<128x256xf32> -> vector<128x256xf32>
    %c0_3 = arith.constant 0 : index
    %c0_4 = arith.constant 0 : index
    %3 = vector.load %arg6[%c0_3, %c0_4] : memref<128x1xf32, #tpu.memory_space<vmem>>, vector<128x1xf32>
    %c0_5 = arith.constant 0 : index
    %c0_6 = arith.constant 0 : index
    %4 = vector.load %arg7[%c0_5, %c0_6] : memref<1x256xf32, #tpu.memory_space<vmem>>, vector<1x256xf32>
    %5 = vector.broadcast %3 : vector<128x1xf32> to vector<128x256xf32>
    %6 = vector.broadcast %4 : vector<1x256xf32> to vector<128x256xf32>
    %7 = arith.addf %5, %6 : vector<128x256xf32>
    %cst_7 = arith.constant 2.000000e+00 : f32
    %8 = vector.broadcast %cst_7 : f32 to vector<128x256xf32>
    %9 = arith.mulf %8, %2 : vector<128x256xf32>
    %10 = arith.subf %7, %9 : vector<128x256xf32>
    %cst_8 = arith.constant 0.000000e+00 : f32
    %11 = vector.broadcast %cst_8 : f32 to vector<128x256xf32>
    %12 = arith.maximumf %10, %11 : vector<128x256xf32>
    %c0_9 = arith.constant 0 : index
    %13 = memref.load %arg3[%c0_9] : memref<1xf32, #tpu.memory_space<smem>>
    %c0_10 = arith.constant 0 : index
    %14 = memref.load %arg2[%c0_10] : memref<1xf32, #tpu.memory_space<smem>>
    %15 = vector.broadcast %14 : f32 to vector<128x256xf32>
    %16 = arith.mulf %12, %15 : vector<128x256xf32>
    %17 = math.exp %16 : vector<128x256xf32>
    %18 = vector.broadcast %13 : f32 to vector<128x256xf32>
    %19 = arith.mulf %18, %17 : vector<128x256xf32>
    %c0_11 = arith.constant 0 : index
    %c0_12 = arith.constant 0 : index
    %20 = vector.load %arg8[%c0_11, %c0_12] : memref<128x256xf32, #tpu.memory_space<vmem>>, vector<128x256xf32>
    tpu.vector_store %arg8[%c0_11, %c0_12], %19 {strides = array<i32>} : memref<128x256xf32, #tpu.memory_space<vmem>>, vector<128x256xf32>,
    return
  }
  func.func @transform_0(%arg0: i32, %arg1: i32) -> i32 {
    %c0_i32 = arith.constant 0 : i32
    %c0_i32_0 = arith.constant 0 : i32
    return %c0_i32 : i32
  }
  func.func @transform_1(%arg0: i32, %arg1: i32) -> i32 {
    %c0_i32 = arith.constant 0 : i32
    %c0_i32_0 = arith.constant 0 : i32
    return %c0_i32 : i32
  }
  func.func @transform_2(%arg0: i32, %arg1: i32) -> (i32, i32) {
    %c0_i32 = arith.constant 0 : i32
    %c0_i32_0 = arith.constant 0 : i32
    return %arg0, %c0_i32 : i32, i32
  }
  func.func @transform_3(%arg0: i32, %arg1: i32) -> (i32, i32) {
    %c0_i32 = arith.constant 0 : i32
    %c0_i32_0 = arith.constant 0 : i32
    return %c0_i32, %arg1 : i32, i32
  }
  func.func @transform_4(%arg0: i32, %arg1: i32) -> (i32, i32) {
    %c0_i32 = arith.constant 0 : i32
    %c0_i32_0 = arith.constant 0 : i32
    return %arg0, %c0_i32 : i32, i32
  }
  func.func @transform_5(%arg0: i32, %arg1: i32) -> (i32, i32) {
    %c0_i32 = arith.constant 0 : i32
    %c0_i32_0 = arith.constant 0 : i32
    return %c0_i32, %arg1 : i32, i32
  }
  func.func @transform_6(%arg0: i32, %arg1: i32) -> (i32, i32) {
    %c0_i32 = arith.constant 0 : i32
    return %arg0, %arg1 : i32, i32
  }
}

</mosaic_0001>

<llo_original>
// kernel: tpu_custom_call.1
$region0: #{tpu_custom_call.1}
  #allocation0 [shape = 'u32[]', space=smem, size = 0x4, offset = 0x4, fixed_abs, tag = 'smem constant byte address 0x4 - core index']
  #allocation1 [shape = 'u32[144,128]{1,0:T(1,128)}', space=vmem, size = 0x12000, scoped, tag = 'internal scratch']
  #allocation2 [shape = 'f32[1]{0:T(128)S(6)}', space=smem, size = 0x200, scoped, tag = 'scoped memory for tpu_custom_call.1']
  #allocation3 [shape = 'f32[1]{0:T(128)S(6)}', space=smem, size = 0x200, scoped, tag = 'scoped memory for tpu_custom_call.1']
  %s0 = inlined_call_operand.<no memory space> [shape: f32[1], index: 0, kind: input, shape index: {}]
  %s1 = inlined_call_operand.<no memory space> [shape: f32[1], index: 1, kind: input, shape index: {}]
  %s2 = inlined_call_operand.vmem [shape: f32[128,32], index: 2, kind: input, shape index: {}]
  %s3 = inlined_call_operand.vmem [shape: f32[32,256], index: 3, kind: input, shape index: {}]
  %s4 = inlined_call_operand.vmem [shape: f32[128,1], index: 4, kind: input, shape index: {}]
  %s5 = inlined_call_operand.vmem [shape: f32[1,256], index: 5, kind: input, shape index: {}]
  %s6 = inlined_call_operand.hbm [shape: f32[128,256], index: 6, kind: output, shape index: {}]
  %s7 = sld [smem:[#allocation0]]
  $region34: #{tpu_custom_call.1} parent=0
    _
  %s9 = ssub.s32 1, %s7
  %s10 = scalar_select 0, %s9, %s7
  %11 = sst [smem:[#allocation2]] %s0
  %12 = sst [smem:[#allocation3]] %s1
  $region1: #{tpu_custom_call.1} parent=0
    #allocation4 [shape = 'u8[131072]{0}', space=vmem, size = 0x20000, scoped, tag = 'output window, operand 0, single buffered']
    #allocation5 [shape = 's32[1]{0}', space=sflag, size = 0x4, scoped, tag = 'scoped memory for tpu_custom_call.1']
    %13 = vsyncpa [#allocation5], 0
    // Predicated region
    $region2: #{tpu_custom_call.1} parent=1 // pred_check
      _
    $region3: #{tpu_custom_call.1} parent=1 // pred_check_branch
      %15 = sbr.rel (0) target = $region5
    $region4: #{tpu_custom_call.1} parent=1 // pred_region
      _
    $region5: #{tpu_custom_call.1} parent=1 // pred_fallthru
      _
    // Predicated region
    $region6: #{tpu_custom_call.1} parent=1 // pred_check
      _
    $region7: #{tpu_custom_call.1} parent=1 // pred_check_branch
      %17 = sbr.rel (0) target = $region9
    $region8: #{tpu_custom_call.1} parent=1 // pred_region
      _
    $region9: #{tpu_custom_call.1} parent=1 // pred_fallthru
      _
    // Predicated region
    $region10: #{tpu_custom_call.1} parent=1 // pred_check
      _
    $region11: #{tpu_custom_call.1} parent=1 // pred_check_branch
      %19 = sbr.rel (0) target = $region13
    $region12: #{tpu_custom_call.1} parent=1 // pred_region
      _
    $region13: #{tpu_custom_call.1} parent=1 // pred_fallthru
      _
    // Predicated region
    $region14: #{tpu_custom_call.1} parent=1 // pred_check
      _
    $region15: #{tpu_custom_call.1} parent=1 // pred_check_branch
      %21 = sbr.rel (0) target = $region17
    $region16: #{tpu_custom_call.1} parent=1 // pred_region
      _
    $region17: #{tpu_custom_call.1} parent=1 // pred_fallthru
      _
    // Predicated region
    $region18: #{tpu_custom_call.1} parent=1 // pred_check
      _
    $region19: #{tpu_custom_call.1} parent=1 // pred_check_branch
      %23 = sbr.rel (0) target = $region21
    $region20: #{tpu_custom_call.1} parent=1 // pred_region
      _
    $region21: #{tpu_custom_call.1} parent=1 // pred_fallthru
      _
    // Predicated region
    $region22: #{tpu_custom_call.1} parent=1 // pred_check
      _
    $region23: #{tpu_custom_call.1} parent=1 // pred_check_branch
      %25 = sbr.rel (0) target = $region25
    $region24: #{tpu_custom_call.1} parent=1 // pred_region
      _
    $region25: #{tpu_custom_call.1} parent=1 // pred_fallthru
      _
    %v26 = vld [vmem:[%s2] sm:$0xff]
    %v27 = vld [vmem:[%s2 + $0x8] sm:$0xff]
    %v28 = vld [vmem:[%s2 + $0x10] sm:$0xff]
    %v29 = vld [vmem:[%s2 + $0x18] sm:$0xff]
    %v30 = vld [vmem:[%s2 + $0x20] sm:$0xff]
    %v31 = vld [vmem:[%s2 + $0x28] sm:$0xff]
    %v32 = vld [vmem:[%s2 + $0x30] sm:$0xff]
    %v33 = vld [vmem:[%s2 + $0x38] sm:$0xff]
    %v34 = vld [vmem:[%s2 + $0x40] sm:$0xff]
    %v35 = vld [vmem:[%s2 + $0x48] sm:$0xff]
    %v36 = vld [vmem:[%s2 + $0x50] sm:$0xff]
    %v37 = vld [vmem:[%s2 + $0x58] sm:$0xff]
    %v38 = vld [vmem:[%s2 + $0x60] sm:$0xff]
    %v39 = vld [vmem:[%s2 + $0x68] sm:$0xff]
    %v40 = vld [vmem:[%s2 + $0x70] sm:$0xff]
    %v41 = vld [vmem:[%s2 + $0x78] sm:$0xff]
    %v42 = vld [vmem:[%s3] sm:$0xff]
    %v43 = vld [vmem:[%s3 + $0x8] sm:$0xff]
    %v44 = vld [vmem:[%s3 + $0x10] sm:$0xff]
    %v45 = vld [vmem:[%s3 + $0x18] sm:$0xff]
    %v46 = vld [vmem:[%s3 + $0x20] sm:$0xff]
    %v47 = vld [vmem:[%s3 + $0x28] sm:$0xff]
    %v48 = vld [vmem:[%s3 + $0x30] sm:$0xff]
    %v49 = vld [vmem:[%s3 + $0x38] sm:$0xff]
    %vm50 = vcmask 261120
    %v52 = vsel %vm50, %v26, 0
    %v55 = vsel %vm50, %v27, 0
    %v58 = vsel %vm50, %v28, 0
    %v61 = vsel %vm50, %v29, 0
    %v64 = vsel %vm50, %v30, 0
    %v67 = vsel %vm50, %v31, 0
    %v70 = vsel %vm50, %v32, 0
    %v73 = vsel %vm50, %v33, 0
    %v76 = vsel %vm50, %v34, 0
    %v79 = vsel %vm50, %v35, 0
    %v82 = vsel %vm50, %v36, 0
    %v85 = vsel %vm50, %v37, 0
    %v88 = vsel %vm50, %v38, 0
    %v91 = vsel %vm50, %v39, 0
    %v94 = vsel %vm50, %v40, 0
    %v97 = vsel %vm50, %v41, 0
    %99 = vmatprep.subr.mxu0 0.0
    %100 = vmatpush1.msra.mxu0 0.0
    %101 = vmatprep.subr.mxu0 0.0
    %102 = vmatpush1.msra.mxu0 0.0
    %103 = vmatprep.subr.mxu0 0.0
    %104 = vmatpush1.msra.mxu0 0.0
    %105 = vmatprep.subr.mxu0 0.0
    %106 = vmatpush1.msra.mxu0 0.0
    %107 = vmatprep.subr.mxu0 0.0
    %108 = vmatpush1.msra.mxu0 0.0
    %109 = vmatprep.subr.mxu0 0.0
    %110 = vmatpush1.msra.mxu0 0.0
    %111 = vmatprep.subr.mxu0 0.0
    %112 = vmatpush1.msra.mxu0 0.0
    %113 = vmatprep.subr.mxu0 0.0
    %114 = vmatpush1.msra.mxu0 0.0
    %115 = vmatprep.subr.mxu0 0.0
    %116 = vmatpush1.msra.mxu0 0.0
    %117 = vmatprep.subr.mxu0 0.0
    %118 = vmatpush1.msra.mxu0 0.0
    %119 = vmatprep.subr.mxu0 0.0
    %120 = vmatpush1.msra.mxu0 0.0
    %121 = vmatprep.subr.mxu0 0.0
    %122 = vmatpush1.msra.mxu0 0.0
    %123 = vmatprep.subr.mxu0 %v49
    %124 = vmatpush1.msra.mxu0 %v48
    %125 = vmatprep.subr.mxu0 %v47
    %126 = vmatpush1.msra.mxu0 %v46
    %127 = vmatprep.subr.mxu0 %v45
    %128 = vmatpush1.msra.mxu0 %v44
    %129 = vmatprep.subr.mxu0 %v43
    %130 = vmatpush1.msra.mxu0 %v42
    %131 = vmatprep.subr.mxu0 0.0
    %132 = vmatpush2.msra.mxu0 0.0
    %133 = vmatprep.subr.mxu0 0.0
    %134 = vmatpush2.msra.mxu0 0.0
    %135 = vmatprep.subr.mxu0 0.0
    %136 = vmatpush2.msra.mxu0 0.0
    %137 = vmatprep.subr.mxu0 0.0
    %138 = vmatpush2.msra.mxu0 0.0
    %139 = vmatprep.subr.mxu0 0.0
    %140 = vmatpush2.msra.mxu0 0.0
    %141 = vmatprep.subr.mxu0 0.0
    %142 = vmatpush2.msra.mxu0 0.0
    %143 = vmatprep.subr.mxu0 0.0
    %144 = vmatpush2.msra.mxu0 0.0
    %145 = vmatprep.subr.mxu0 0.0
    %146 = vmatpush2.msra.mxu0 0.0
    %147 = vmatprep.subr.mxu0 0.0
    %148 = vmatpush2.msra.mxu0 0.0
    %149 = vmatprep.subr.mxu0 0.0
    %150 = vmatpush2.msra.mxu0 0.0
    %151 = vmatprep.subr.mxu0 0.0
    %152 = vmatpush2.msra.mxu0 0.0
    %153 = vmatprep.subr.mxu0 0.0
    %154 = vmatpush2.msra.mxu0 0.0
    %155 = vmatprep.subr.mxu0 0.0
    %156 = vmatpush2.msra.mxu0 0.0
    %157 = vmatprep.subr.mxu0 0.0
    %158 = vmatpush2.msra.mxu0 0.0
    %159 = vmatprep.subr.mxu0 0.0
    %160 = vmatpush2.msra.mxu0 0.0
    %161 = vmatprep.subr.mxu0 0.0
    %162 = vmatpush2.msra.mxu0 0.0
    %163 = vmatprep.mubr.f32.mxu0 0.0
    %164 = vmatmul.mubr.f32.gmra.mxu0 %v52
    %v165 = vpop.f32.mrf.mxu0
    %v166 = vadd.f32 0.0, %v165
    %v167 = vpop.f32.mrf.mxu0
    %v168 = vadd.f32 0.0, %v167
    %169 = vmatprep.mubr.f32.mxu0 0.0
    %170 = vmatmul.mubr.f32.gmra.mxu0 %v55
    %v171 = vpop.f32.mrf.mxu0
    %v172 = vadd.f32 0.0, %v171
    %v173 = vpop.f32.mrf.mxu0
    %v174 = vadd.f32 0.0, %v173
    %175 = vmatprep.mubr.f32.mxu0 0.0
    %176 = vmatmul.mubr.f32.gmra.mxu0 %v58
    %v177 = vpop.f32.mrf.mxu0
    %v178 = vadd.f32 0.0, %v177
    %v179 = vpop.f32.mrf.mxu0
    %v180 = vadd.f32 0.0, %v179
    %181 = vmatprep.mubr.f32.mxu0 0.0
    %182 = vmatmul.mubr.f32.gmra.mxu0 %v61
    %v183 = vpop.f32.mrf.mxu0
    %v184 = vadd.f32 0.0, %v183
    %v185 = vpop.f32.mrf.mxu0
    %v186 = vadd.f32 0.0, %v185
    %187 = vmatprep.mubr.f32.mxu0 0.0
    %188 = vmatmul.mubr.f32.gmra.mxu0 %v64
    %v189 = vpop.f32.mrf.mxu0
    %v190 = vadd.f32 0.0, %v189
    %v191 = vpop.f32.mrf.mxu0
    %v192 = vadd.f32 0.0, %v191
    %193 = vmatprep.mubr.f32.mxu0 0.0
    %194 = vmatmul.mubr.f32.gmra.mxu0 %v67
    %v195 = vpop.f32.mrf.mxu0
    %v196 = vadd.f32 0.0, %v195
    %v197 = vpop.f32.mrf.mxu0
    %v198 = vadd.f32 0.0, %v197
    %199 = vmatprep.mubr.f32.mxu0 0.0
    %200 = vmatmul.mubr.f32.gmra.mxu0 %v70
    %v201 = vpop.f32.mrf.mxu0
    %v202 = vadd.f32 0.0, %v201
    %v203 = vpop.f32.mrf.mxu0
    %v204 = vadd.f32 0.0, %v203
    %205 = vmatprep.mubr.f32.mxu0 0.0
    %206 = vmatmul.mubr.f32.gmra.mxu0 %v73
    %v207 = vpop.f32.mrf.mxu0
    %v208 = vadd.f32 0.0, %v207
    %v209 = vpop.f32.mrf.mxu0
    %v210 = vadd.f32 0.0, %v209
    %211 = vmatprep.mubr.f32.mxu0 0.0
    %212 = vmatmul.mubr.f32.gmra.mxu0 %v76
    %v213 = vpop.f32.mrf.mxu0
    %v214 = vadd.f32 0.0, %v213
    %v215 = vpop.f32.mrf.mxu0
    %v216 = vadd.f32 0.0, %v215
    %217 = vmatprep.mubr.f32.mxu0 0.0
    %218 = vmatmul.mubr.f32.gmra.mxu0 %v79
    %v219 = vpop.f32.mrf.mxu0
    %v220 = vadd.f32 0.0, %v219
    %v221 = vpop.f32.mrf.mxu0
    %v222 = vadd.f32 0.0, %v221
    %223 = vmatprep.mubr.f32.mxu0 0.0
    %224 = vmatmul.mubr.f32.gmra.mxu0 %v82
    %v225 = vpop.f32.mrf.mxu0
    %v226 = vadd.f32 0.0, %v225
    %v227 = vpop.f32.mrf.mxu0
    %v228 = vadd.f32 0.0, %v227
    %229 = vmatprep.mubr.f32.mxu0 0.0
    %230 = vmatmul.mubr.f32.gmra.mxu0 %v85
    %v231 = vpop.f32.mrf.mxu0
    %v232 = vadd.f32 0.0, %v231
    %v233 = vpop.f32.mrf.mxu0
    %v234 = vadd.f32 0.0, %v233
    %235 = vmatprep.mubr.f32.mxu0 0.0
    %236 = vmatmul.mubr.f32.gmra.mxu0 %v88
    %v237 = vpop.f32.mrf.mxu0
    %v238 = vadd.f32 0.0, %v237
    %v239 = vpop.f32.mrf.mxu0
    %v240 = vadd.f32 0.0, %v239
    %241 = vmatprep.mubr.f32.mxu0 0.0
    %242 = vmatmul.mubr.f32.gmra.mxu0 %v91
    %v243 = vpop.f32.mrf.mxu0
    %v244 = vadd.f32 0.0, %v243
    %v245 = vpop.f32.mrf.mxu0
    %v246 = vadd.f32 0.0, %v245
    %247 = vmatprep.mubr.f32.mxu0 0.0
    %248 = vmatmul.mubr.f32.gmra.mxu0 %v94
    %v249 = vpop.f32.mrf.mxu0
    %v250 = vadd.f32 0.0, %v249
    %v251 = vpop.f32.mrf.mxu0
    %v252 = vadd.f32 0.0, %v251
    %253 = vmatprep.mubr.f32.mxu0 0.0
    %254 = vmatmul.mubr.f32.gmra.mxu0 %v97
    %v255 = vpop.f32.mrf.mxu0
    %v256 = vadd.f32 0.0, %v255
    %v257 = vpop.f32.mrf.mxu0
    %v258 = vadd.f32 0.0, %v257
    %259 = vdwg.mxu0
    %v260 = vld [vmem:[%s4] sm:$0xff]
    %v261 = vld [vmem:[%s4 + $0x8] sm:$0xff]
    %v262 = vld [vmem:[%s4 + $0x10] sm:$0xff]
    %v263 = vld [vmem:[%s4 + $0x18] sm:$0xff]
    %v264 = vld [vmem:[%s4 + $0x20] sm:$0xff]
    %v265 = vld [vmem:[%s4 + $0x28] sm:$0xff]
    %v266 = vld [vmem:[%s4 + $0x30] sm:$0xff]
    %v267 = vld [vmem:[%s4 + $0x38] sm:$0xff]
    %v268 = vld [vmem:[%s4 + $0x40] sm:$0xff]
    %v269 = vld [vmem:[%s4 + $0x48] sm:$0xff]
    %v270 = vld [vmem:[%s4 + $0x50] sm:$0xff]
    %v271 = vld [vmem:[%s4 + $0x58] sm:$0xff]
    %v272 = vld [vmem:[%s4 + $0x60] sm:$0xff]
    %v273 = vld [vmem:[%s4 + $0x68] sm:$0xff]
    %v274 = vld [vmem:[%s4 + $0x70] sm:$0xff]
    %v275 = vld [vmem:[%s4 + $0x78] sm:$0xff]
    %v276 = vld [vmem:[%s5] sm:$0x3]
    %278 = vset.pattern.permute.xlu0 0
    %279 = vperm.xlu0 %278, %v260
    %v280 = vpop.permute.xlu0 %279
    %283 = vset.pattern.permute.xlu0 0
    %284 = vperm.xlu0 %283, %v261
    %v285 = vpop.permute.xlu0 %284
    %288 = vset.pattern.permute.xlu0 0
    %289 = vperm.xlu0 %288, %v262
    %v290 = vpop.permute.xlu0 %289
    %293 = vset.pattern.permute.xlu0 0
    %294 = vperm.xlu0 %293, %v263
    %v295 = vpop.permute.xlu0 %294
    %298 = vset.pattern.permute.xlu0 0
    %299 = vperm.xlu0 %298, %v264
    %v300 = vpop.permute.xlu0 %299
    %303 = vset.pattern.permute.xlu0 0
    %304 = vperm.xlu0 %303, %v265
    %v305 = vpop.permute.xlu0 %304
    %308 = vset.pattern.permute.xlu0 0
    %309 = vperm.xlu0 %308, %v266
    %v310 = vpop.permute.xlu0 %309
    %313 = vset.pattern.permute.xlu0 0
    %314 = vperm.xlu0 %313, %v267
    %v315 = vpop.permute.xlu0 %314
    %318 = vset.pattern.permute.xlu0 0
    %319 = vperm.xlu0 %318, %v268
    %v320 = vpop.permute.xlu0 %319
    %323 = vset.pattern.permute.xlu0 0
    %324 = vperm.xlu0 %323, %v269
    %v325 = vpop.permute.xlu0 %324
    %328 = vset.pattern.permute.xlu0 0
    %329 = vperm.xlu0 %328, %v270
    %v330 = vpop.permute.xlu0 %329
    %333 = vset.pattern.permute.xlu0 0
    %334 = vperm.xlu0 %333, %v271
    %v335 = vpop.permute.xlu0 %334
    %338 = vset.pattern.permute.xlu0 0
    %339 = vperm.xlu0 %338, %v272
    %v340 = vpop.permute.xlu0 %339
    %343 = vset.pattern.permute.xlu0 0
    %344 = vperm.xlu0 %343, %v273
    %v345 = vpop.permute.xlu0 %344
    %348 = vset.pattern.permute.xlu0 0
    %349 = vperm.xlu0 %348, %v274
    %v350 = vpop.permute.xlu0 %349
    %353 = vset.pattern.permute.xlu0 0
    %354 = vperm.xlu0 %353, %v275
    %v355 = vpop.permute.xlu0 %354
    %v358 = vlaneseq
    %v359 = vshrl.u32 %v358, 7
    %v360 = vsub.s32 0, %v359
    %v361 = vrot.slane %v276, %v360
    %v362 = vlaneseq
    %v363 = vshrl.u32 %v362, 7
    %v364 = vsub.s32 1, %v363
    %v365 = vrot.slane %v276, %v364
    %v368 = vadd.f32 %v280, %v361
    %v369 = vadd.f32 %v280, %v365
    %v370 = vadd.f32 %v285, %v361
    %v371 = vadd.f32 %v285, %v365
    %v372 = vadd.f32 %v290, %v361
    %v373 = vadd.f32 %v290, %v365
    %v374 = vadd.f32 %v295, %v361
    %v375 = vadd.f32 %v295, %v365
    %v376 = vadd.f32 %v300, %v361
    %v377 = vadd.f32 %v300, %v365
    %v378 = vadd.f32 %v305, %v361
    %v379 = vadd.f32 %v305, %v365
    %v380 = vadd.f32 %v310, %v361
    %v381 = vadd.f32 %v310, %v365
    %v382 = vadd.f32 %v315, %v361
    %v383 = vadd.f32 %v315, %v365
    %v384 = vadd.f32 %v320, %v361
    %v385 = vadd.f32 %v320, %v365
    %v386 = vadd.f32 %v325, %v361
    %v387 = vadd.f32 %v325, %v365
    %v388 = vadd.f32 %v330, %v361
    %v389 = vadd.f32 %v330, %v365
    %v390 = vadd.f32 %v335, %v361
    %v391 = vadd.f32 %v335, %v365
    %v392 = vadd.f32 %v340, %v361
    %v393 = vadd.f32 %v340, %v365
    %v394 = vadd.f32 %v345, %v361
    %v395 = vadd.f32 %v345, %v365
    %v396 = vadd.f32 %v350, %v361
    %v397 = vadd.f32 %v350, %v365
    %v398 = vadd.f32 %v355, %v361
    %v399 = vadd.f32 %v355, %v365
    %v400 = vmul.f32 %v166, 2.0
    %v401 = vmul.f32 %v168, 2.0
    %v402 = vmul.f32 %v172, 2.0
    %v403 = vmul.f32 %v174, 2.0
    %v404 = vmul.f32 %v178, 2.0
    %v405 = vmul.f32 %v180, 2.0
    %v406 = vmul.f32 %v184, 2.0
    %v407 = vmul.f32 %v186, 2.0
    %v408 = vmul.f32 %v190, 2.0
    %v409 = vmul.f32 %v192, 2.0
    %v410 = vmul.f32 %v196, 2.0
    %v411 = vmul.f32 %v198, 2.0
    %v412 = vmul.f32 %v202, 2.0
    %v413 = vmul.f32 %v204, 2.0
    %v414 = vmul.f32 %v208, 2.0
    %v415 = vmul.f32 %v210, 2.0
    %v416 = vmul.f32 %v214, 2.0
    %v417 = vmul.f32 %v216, 2.0
    %v418 = vmul.f32 %v220, 2.0
    %v419 = vmul.f32 %v222, 2.0
    %v420 = vmul.f32 %v226, 2.0
    %v421 = vmul.f32 %v228, 2.0
    %v422 = vmul.f32 %v232, 2.0
    %v423 = vmul.f32 %v234, 2.0
    %v424 = vmul.f32 %v238, 2.0
    %v425 = vmul.f32 %v240, 2.0
    %v426 = vmul.f32 %v244, 2.0
    %v427 = vmul.f32 %v246, 2.0
    %v428 = vmul.f32 %v250, 2.0
    %v429 = vmul.f32 %v252, 2.0
    %v430 = vmul.f32 %v256, 2.0
    %v431 = vmul.f32 %v258, 2.0
    %v432 = vsub.f32 %v368, %v400
    %v433 = vsub.f32 %v369, %v401
    %v434 = vsub.f32 %v370, %v402
    %v435 = vsub.f32 %v371, %v403
    %v436 = vsub.f32 %v372, %v404
    %v437 = vsub.f32 %v373, %v405
    %v438 = vsub.f32 %v374, %v406
    %v439 = vsub.f32 %v375, %v407
    %v440 = vsub.f32 %v376, %v408
    %v441 = vsub.f32 %v377, %v409
    %v442 = vsub.f32 %v378, %v410
    %v443 = vsub.f32 %v379, %v411
    %v444 = vsub.f32 %v380, %v412
    %v445 = vsub.f32 %v381, %v413
    %v446 = vsub.f32 %v382, %v414
    %v447 = vsub.f32 %v383, %v415
    %v448 = vsub.f32 %v384, %v416
    %v449 = vsub.f32 %v385, %v417
    %v450 = vsub.f32 %v386, %v418
    %v451 = vsub.f32 %v387, %v419
    %v452 = vsub.f32 %v388, %v420
    %v453 = vsub.f32 %v389, %v421
    %v454 = vsub.f32 %v390, %v422
    %v455 = vsub.f32 %v391, %v423
    %v456 = vsub.f32 %v392, %v424
    %v457 = vsub.f32 %v393, %v425
    %v458 = vsub.f32 %v394, %v426
    %v459 = vsub.f32 %v395, %v427
    %v460 = vsub.f32 %v396, %v428
    %v461 = vsub.f32 %v397, %v429
    %v462 = vsub.f32 %v398, %v430
    %v463 = vsub.f32 %v399, %v431
    %v464 = vmax.f32 %v432, 0.0
    %v465 = vmax.f32 %v433, 0.0
    %v466 = vmax.f32 %v434, 0.0
    %v467 = vmax.f32 %v435, 0.0
    %v468 = vmax.f32 %v436, 0.0
    %v469 = vmax.f32 %v437, 0.0
    %v470 = vmax.f32 %v438, 0.0
    %v471 = vmax.f32 %v439, 0.0
    %v472 = vmax.f32 %v440, 0.0
    %v473 = vmax.f32 %v441, 0.0
    %v474 = vmax.f32 %v442, 0.0
    %v475 = vmax.f32 %v443, 0.0
    %v476 = vmax.f32 %v444, 0.0
    %v477 = vmax.f32 %v445, 0.0
    %v478 = vmax.f32 %v446, 0.0
    %v479 = vmax.f32 %v447, 0.0
    %v480 = vmax.f32 %v448, 0.0
    %v481 = vmax.f32 %v449, 0.0
    %v482 = vmax.f32 %v450, 0.0
    %v483 = vmax.f32 %v451, 0.0
    %v484 = vmax.f32 %v452, 0.0
    %v485 = vmax.f32 %v453, 0.0
    %v486 = vmax.f32 %v454, 0.0
    %v487 = vmax.f32 %v455, 0.0
    %v488 = vmax.f32 %v456, 0.0
    %v489 = vmax.f32 %v457, 0.0
    %v490 = vmax.f32 %v458, 0.0
    %v491 = vmax.f32 %v459, 0.0
    %v492 = vmax.f32 %v460, 0.0
    %v493 = vmax.f32 %v461, 0.0
    %v494 = vmax.f32 %v462, 0.0
    %v495 = vmax.f32 %v463, 0.0
    %s496 = sld [smem:[#allocation3]]
    %s497 = sld [smem:[#allocation2]]
    %v498 = vstv %s497
    %v499 = vmul.f32 %v464, %v498
    %v500 = vmul.f32 %v465, %v498
    %v501 = vmul.f32 %v466, %v498
    %v502 = vmul.f32 %v467, %v498
    %v503 = vmul.f32 %v468, %v498
    %v504 = vmul.f32 %v469, %v498
    %v505 = vmul.f32 %v470, %v498
    %v506 = vmul.f32 %v471, %v498
    %v507 = vmul.f32 %v472, %v498
    %v508 = vmul.f32 %v473, %v498
    %v509 = vmul.f32 %v474, %v498
    %v510 = vmul.f32 %v475, %v498
    %v511 = vmul.f32 %v476, %v498
    %v512 = vmul.f32 %v477, %v498
    %v513 = vmul.f32 %v478, %v498
    %v514 = vmul.f32 %v479, %v498
    %v515 = vmul.f32 %v480, %v498
    %v516 = vmul.f32 %v481, %v498
    %v517 = vmul.f32 %v482, %v498
    %v518 = vmul.f32 %v483, %v498
    %v519 = vmul.f32 %v484, %v498
    %v520 = vmul.f32 %v485, %v498
    %v521 = vmul.f32 %v486, %v498
    %v522 = vmul.f32 %v487, %v498
    %v523 = vmul.f32 %v488, %v498
    %v524 = vmul.f32 %v489, %v498
    %v525 = vmul.f32 %v490, %v498
    %v526 = vmul.f32 %v491, %v498
    %v527 = vmul.f32 %v492, %v498
    %v528 = vmul.f32 %v493, %v498
    %v529 = vmul.f32 %v494, %v498
    %v530 = vmul.f32 %v495, %v498
    %v531 = vmul.f32 %v499, 1.442695
    %v532 = vpow.pop %v531
    %v533 = vmul.f32 %v500, 1.442695
    %v534 = vpow.pop %v533
    %v535 = vmul.f32 %v501, 1.442695
    %v536 = vpow.pop %v535
    %v537 = vmul.f32 %v502, 1.442695
    %v538 = vpow.pop %v537
    %v539 = vmul.f32 %v503, 1.442695
    %v540 = vpow.pop %v539
    %v541 = vmul.f32 %v504, 1.442695
    %v542 = vpow.pop %v541
    %v543 = vmul.f32 %v505, 1.442695
    %v544 = vpow.pop %v543
    %v545 = vmul.f32 %v506, 1.442695
    %v546 = vpow.pop %v545
    %v547 = vmul.f32 %v507, 1.442695
    %v548 = vpow.pop %v547
    %v549 = vmul.f32 %v508, 1.442695
    %v550 = vpow.pop %v549
    %v551 = vmul.f32 %v509, 1.442695
    %v552 = vpow.pop %v551
    %v553 = vmul.f32 %v510, 1.442695
    %v554 = vpow.pop %v553
    %v555 = vmul.f32 %v511, 1.442695
    %v556 = vpow.pop %v555
    %v557 = vmul.f32 %v512, 1.442695
    %v558 = vpow.pop %v557
    %v559 = vmul.f32 %v513, 1.442695
    %v560 = vpow.pop %v559
    %v561 = vmul.f32 %v514, 1.442695
    %v562 = vpow.pop %v561
    %v563 = vmul.f32 %v515, 1.442695
    %v564 = vpow.pop %v563
    %v565 = vmul.f32 %v516, 1.442695
    %v566 = vpow.pop %v565
    %v567 = vmul.f32 %v517, 1.442695
    %v568 = vpow.pop %v567
    %v569 = vmul.f32 %v518, 1.442695
    %v570 = vpow.pop %v569
    %v571 = vmul.f32 %v519, 1.442695
    %v572 = vpow.pop %v571
    %v573 = vmul.f32 %v520, 1.442695
    %v574 = vpow.pop %v573
    %v575 = vmul.f32 %v521, 1.442695
    %v576 = vpow.pop %v575
    %v577 = vmul.f32 %v522, 1.442695
    %v578 = vpow.pop %v577
    %v579 = vmul.f32 %v523, 1.442695
    %v580 = vpow.pop %v579
    %v581 = vmul.f32 %v524, 1.442695
    %v582 = vpow.pop %v581
    %v583 = vmul.f32 %v525, 1.442695
    %v584 = vpow.pop %v583
    %v585 = vmul.f32 %v526, 1.442695
    %v586 = vpow.pop %v585
    %v587 = vmul.f32 %v527, 1.442695
    %v588 = vpow.pop %v587
    %v589 = vmul.f32 %v528, 1.442695
    %v590 = vpow.pop %v589
    %v591 = vmul.f32 %v529, 1.442695
    %v592 = vpow.pop %v591
    %v593 = vmul.f32 %v530, 1.442695
    %v594 = vpow.pop %v593
    %v595 = vstv %s496
    %v596 = vmul.f32 %v595, %v532
    %v597 = vmul.f32 %v595, %v534
    %v598 = vmul.f32 %v595, %v536
    %v599 = vmul.f32 %v595, %v538
    %v600 = vmul.f32 %v595, %v540
    %v601 = vmul.f32 %v595, %v542
    %v602 = vmul.f32 %v595, %v544
    %v603 = vmul.f32 %v595, %v546
    %v604 = vmul.f32 %v595, %v548
    %v605 = vmul.f32 %v595, %v550
    %v606 = vmul.f32 %v595, %v552
    %v607 = vmul.f32 %v595, %v554
    %v608 = vmul.f32 %v595, %v556
    %v609 = vmul.f32 %v595, %v558
    %v610 = vmul.f32 %v595, %v560
    %v611 = vmul.f32 %v595, %v562
    %v612 = vmul.f32 %v595, %v564
    %v613 = vmul.f32 %v595, %v566
    %v614 = vmul.f32 %v595, %v568
    %v615 = vmul.f32 %v595, %v570
    %v616 = vmul.f32 %v595, %v572
    %v617 = vmul.f32 %v595, %v574
    %v618 = vmul.f32 %v595, %v576
    %v619 = vmul.f32 %v595, %v578
    %v620 = vmul.f32 %v595, %v580
    %v621 = vmul.f32 %v595, %v582
    %v622 = vmul.f32 %v595, %v584
    %v623 = vmul.f32 %v595, %v586
    %v624 = vmul.f32 %v595, %v588
    %v625 = vmul.f32 %v595, %v590
    %v626 = vmul.f32 %v595, %v592
    %v627 = vmul.f32 %v595, %v594
    %628 = vst [vmem:[#allocation4] sm:$0xff] %v596
    %629 = vst [vmem:[#allocation4 + $0x8] sm:$0xff] %v597
    %630 = vst [vmem:[#allocation4 + $0x10] sm:$0xff] %v598
    %631 = vst [vmem:[#allocation4 + $0x18] sm:$0xff] %v599
    %632 = vst [vmem:[#allocation4 + $0x20] sm:$0xff] %v600
    %633 = vst [vmem:[#allocation4 + $0x28] sm:$0xff] %v601
    %634 = vst [vmem:[#allocation4 + $0x30] sm:$0xff] %v602
    %635 = vst [vmem:[#allocation4 + $0x38] sm:$0xff] %v603
    %636 = vst [vmem:[#allocation4 + $0x40] sm:$0xff] %v604
    %637 = vst [vmem:[#allocation4 + $0x48] sm:$0xff] %v605
    %638 = vst [vmem:[#allocation4 + $0x50] sm:$0xff] %v606
    %639 = vst [vmem:[#allocation4 + $0x58] sm:$0xff] %v607
    %640 = vst [vmem:[#allocation4 + $0x60] sm:$0xff] %v608
    %641 = vst [vmem:[#allocation4 + $0x68] sm:$0xff] %v609
    %642 = vst [vmem:[#allocation4 + $0x70] sm:$0xff] %v610
    %643 = vst [vmem:[#allocation4 + $0x78] sm:$0xff] %v611
    %644 = vst [vmem:[#allocation4 + $0x80] sm:$0xff] %v612
    %645 = vst [vmem:[#allocation4 + $0x88] sm:$0xff] %v613
    %646 = vst [vmem:[#allocation4 + $0x90] sm:$0xff] %v614
    %647 = vst [vmem:[#allocation4 + $0x98] sm:$0xff] %v615
    %648 = vst [vmem:[#allocation4 + $0xa0] sm:$0xff] %v616
    %649 = vst [vmem:[#allocation4 + $0xa8] sm:$0xff] %v617
    %650 = vst [vmem:[#allocation4 + $0xb0] sm:$0xff] %v618
    %651 = vst [vmem:[#allocation4 + $0xb8] sm:$0xff] %v619
    %652 = vst [vmem:[#allocation4 + $0xc0] sm:$0xff] %v620
    %653 = vst [vmem:[#allocation4 + $0xc8] sm:$0xff] %v621
    %654 = vst [vmem:[#allocation4 + $0xd0] sm:$0xff] %v622
    %655 = vst [vmem:[#allocation4 + $0xd8] sm:$0xff] %v623
    %656 = vst [vmem:[#allocation4 + $0xe0] sm:$0xff] %v624
    %657 = vst [vmem:[#allocation4 + $0xe8] sm:$0xff] %v625
    %658 = vst [vmem:[#allocation4 + $0xf0] sm:$0xff] %v626
    %659 = vst [vmem:[#allocation4 + $0xf8] sm:$0xff] %v627
    // Predicated region
    $region26: #{tpu_custom_call.1} parent=1 // pred_check
      _
    $region27: #{tpu_custom_call.1} parent=1 // pred_check_branch
      %661 = sbr.rel (0) target = $region29
    $region28: #{tpu_custom_call.1} parent=1 // pred_region
      %s663 = ssub.s32 4096, 4096
      %664 = vsyncadd [#allocation5], %s663
      %s665 = sshll.u32 [#allocation4], 4
      %s666 = int_to_ptr.vmem [resolvable:$true] %s665
      %671 = dma.vmem_to_hbm [thread:$0]  %s666, 4096, %s6, [#allocation5], 256, 256, 16
    $region29: #{tpu_custom_call.1} parent=1 // pred_fallthru
      _
    // Predicated region
    $region30: #{tpu_custom_call.1} parent=1 // pred_check
      _
    $region31: #{tpu_custom_call.1} parent=1 // pred_check_branch
      %673 = sbr.rel (0) target = $region33
    $region32: #{tpu_custom_call.1} parent=1 // pred_region
      %674 = dma.done [#allocation5], 4096
    $region33: #{tpu_custom_call.1} parent=1 // pred_fallthru
      _
    %675 = vsyncpa [#allocation5], 1

</llo_original>
